<compile_context>
chip_gen: v5e
topology: v5e:2x2
jax: 0.10.0
libtpu: 0.0.40
codegen_flags: <defaults>
</compile_context>

<pallas_src>
import functools
import math

import jax
import jax.numpy as jnp
from jax import lax
from jax.experimental import pallas as pl
from jax.experimental.pallas import tpu as pltpu

_LANES = 1024          # lane-dense slab width (multiple of 128)
_MAX_BLOCK_ROWS = 512  # (512, 1024) f32 tile = 2 MiB


def _dropout_kernel(seed_ref, x_ref, out_ref, mask_ref, *,
                    threshold, inv_keep, block_rows, lanes):
    shape = x_ref.shape

    # Global flat element index of every element in this block (independent of tiling).
    row = lax.broadcasted_iota(jnp.int32, shape, 0).astype(jnp.uint32)
    col = lax.broadcasted_iota(jnp.int32, shape, 1).astype(jnp.uint32)
    g_row = (pl.program_id(0) * block_rows).astype(jnp.uint32) + row
    idx = g_row * jnp.uint32(lanes) + col

    # Counter-based PRNG: mix (seed, index) with a strong 32-bit finalizer (lowbias32).
    seed = seed_ref[0].astype(jnp.uint32)
    h = idx + seed * jnp.uint32(0x9E3779B9)
    h = h ^ (h >> 16)
    h = h * jnp.uint32(0x21F0AAAD)
    h = h ^ (h >> 15)
    h = h * jnp.uint32(0x735A2D97)
    h = h ^ (h >> 15)

    # (h >> 9) is uniform on [0, 2^23); "< ceil(keep*2^23)" == "(h>>9)*2^-23 < keep".
    keep = (h >> 9) < jnp.uint32(threshold)

    dtype = x_ref.dtype
    mask = jnp.where(keep, jnp.asarray(inv_keep, dtype), jnp.asarray(0, dtype))
    mask_ref[...] = mask
    out_ref[...] = x_ref[...] * mask


def noseed_transfer_dropout(x, p: float = 0.5, seed: int = 0, training: bool = True):
    """Forward pass of NoSeedTransferModuleDropout.

    Returns (output, mask, new_seed_state); new_seed_state is the LCG-updated s64 seed
    the reference module stashes for the next call.
    """
    # LCG seed update from BuildDropout (s64: 214013*seed + 2531011, two's complement).
    new_seed_u64 = (214013 * int(seed) + 2531011) & ((1 << 64) - 1)
    new_seed_s64 = new_seed_u64 - (1 << 64) if new_seed_u64 >= (1 << 63) else new_seed_u64

    if (not training) or p == 0.0:
        return x, jnp.ones_like(x), new_seed_s64
    if p >= 1.0:
        z = jnp.zeros_like(x)
        return z, z, new_seed_s64

    keep = 1.0 - float(p)
    inv_keep = 1.0 / keep
    threshold = min(1 << 23, int(math.ceil(keep * float(1 << 23))))

    orig_shape = x.shape
    n = x.size
    flat = x.reshape(-1)

    # Lane-dense 2D slab [rows, _LANES]; pad only when n is not a multiple of _LANES.
    n_pad = -(-n // _LANES) * _LANES
    padded = n_pad != n
    if padded:
        flat = jnp.pad(flat, (0, n_pad - n))
    rows = n_pad // _LANES
    x2d = flat.reshape(rows, _LANES)

    block_rows = rows if rows <= _MAX_BLOCK_ROWS else _MAX_BLOCK_ROWS
    grid = (pl.cdiv(rows, block_rows),)

    # Fold the 64-bit LCG state into a 32-bit seed for the in-kernel hash.
    seed32 = (new_seed_u64 ^ (new_seed_u64 >> 32)) & 0xFFFFFFFF
    if seed32 >= 1 << 31:
        seed32 -= 1 << 32
    seed_arr = jnp.array([seed32], dtype=jnp.int32)

    kernel = functools.partial(
        _dropout_kernel, threshold=threshold, inv_keep=inv_keep,
        block_rows=block_rows, lanes=_LANES)

    out2d, mask2d = pl.pallas_call(
        kernel,
        out_shape=(
            jax.ShapeDtypeStruct(x2d.shape, x.dtype),
            jax.ShapeDtypeStruct(x2d.shape, x.dtype),
        ),
        grid=grid,
        in_specs=[
            pl.BlockSpec(memory_space=pltpu.MemorySpace.SMEM),      # seed scalar
            pl.BlockSpec((block_rows, _LANES), lambda i: (i, 0)),   # input tile
        ],
        out_specs=(
            pl.BlockSpec((block_rows, _LANES), lambda i: (i, 0)),   # output
            pl.BlockSpec((block_rows, _LANES), lambda i: (i, 0)),   # mask
        ),
        compiler_params=pltpu.CompilerParams(
            dimension_semantics=("parallel",),
            vmem_limit_bytes=48 * 1024 * 1024,
        ),
    )(seed_arr, x2d)

    if padded:
        out = out2d.reshape(-1)[:n].reshape(orig_shape)
        mask = mask2d.reshape(-1)[:n].reshape(orig_shape)
    else:
        out = out2d.reshape(orig_shape)
        mask = mask2d.reshape(orig_shape)
    return out, mask, new_seed_s64


if __name__ == "__main__":
    key = jax.random.PRNGKey(0)
    p = 0.5
    keep = 1.0 - p

    # NCHW activation tensor, consistent with a typical Dropout input.
    x = jax.random.normal(key, (2, 4, 16, 16), dtype=jnp.float32)
    out, mask, new_seed = noseed_transfer_dropout(x, p=p, seed=1234, training=True)
    out = jax.block_until_ready(out)
    mask = jax.block_until_ready(mask)

    mask_np = jax.device_get(mask)
    # mask values must be exactly 0 or 1/keep (1/0.5 is exact)
    assert ((mask_np == 0.0) | (abs(mask_np - 1.0 / keep) < 1e-6)).all()
    # output must equal input * mask
    assert jnp.allclose(out, x * mask, atol=1e-6)
    # roughly keep fraction of elements survive
    kept_frac = float((mask_np != 0.0).mean())
    assert 0.35 < kept_frac < 0.65, kept_frac
    # LCG seed update
    assert new_seed == 214013 * 1234 + 2531011

    # Ragged size (exercises the pad/unpad path).
    x2 = jax.random.normal(jax.random.PRNGKey(1), (5, 7, 9), dtype=jnp.float32)
    out2, mask2, _ = noseed_transfer_dropout(x2, p=0.25, seed=7, training=True)
    out2 = jax.block_until_ready(out2)
    assert out2.shape == x2.shape and mask2.shape == x2.shape
    assert jnp.allclose(out2, x2 * mask2, atol=1e-6)

    # bfloat16 input.
    xb = x.astype(jnp.bfloat16)
    outb, maskb, _ = noseed_transfer_dropout(xb, p=p, seed=99, training=True)
    outb = jax.block_until_ready(outb)
    assert outb.dtype == jnp.bfloat16
    assert jnp.array_equal(outb, xb * maskb)

    # Eval mode is identity.
    out_eval, _, _ = noseed_transfer_dropout(x, p=p, seed=1234, training=False)
    assert jnp.array_equal(out_eval, x)

    print("KERNEL_OK")
</pallas_src>

<mosaic_0001>
module attributes {stable_mosaic.version = 11 : i64} {
  func.func @_dropout_kernel(%arg0: i32, %arg1: memref<1xi32, #tpu.memory_space<smem>>, %arg2: memref<2x1024xf32, #tpu.memory_space<vmem>>, %arg3: memref<2x1024xf32, #tpu.memory_space<vmem>>, %arg4: memref<2x1024xf32, #tpu.memory_space<vmem>>) attributes {dimension_semantics = [#tpu.dimension_semantics<parallel>], iteration_bounds = array<i64: 1>, scalar_prefetch = 0 : i64, scratch_operands = 0 : i64, tpu.core_type = #tpu.core_type<tc>, window_params = [{transform_indices = @transform_0, window_bounds = array<i64: 1>}, {transform_indices = @transform_1, window_bounds = array<i64: 2, 1024>}, {transform_indices = @transform_2, window_bounds = array<i64: 2, 1024>}, {transform_indices = @transform_3, window_bounds = array<i64: 2, 1024>}]} {
    %0 = tpu.iota {dimensions = array<i32: 0>} : vector<2x1024xi32>
    %1 = tpu.iota {dimensions = array<i32: 1>} : vector<2x1024xi32>
    %c2_i32 = arith.constant 2 : i32
    %2 = arith.muli %arg0, %c2_i32 : i32
    %3 = vector.broadcast %2 : i32 to vector<2x1024xi32>
    %4 = arith.addi %3, %0 : vector<2x1024xi32>
    %c1024_i32 = arith.constant 1024 : i32
    %5 = vector.broadcast %c1024_i32 : i32 to vector<2x1024xi32>
    %6 = arith.muli %4, %5 : vector<2x1024xi32>
    %7 = arith.addi %6, %1 : vector<2x1024xi32>
    %c0 = arith.constant 0 : index
    %8 = memref.load %arg1[%c0] : memref<1xi32, #tpu.memory_space<smem>>
    %c-1640531527_i32 = arith.constant -1640531527 : i32
    %9 = arith.muli %8, %c-1640531527_i32 : i32
    %10 = vector.broadcast %9 : i32 to vector<2x1024xi32>
    %11 = arith.addi %7, %10 : vector<2x1024xi32>
    %c16_i32 = arith.constant 16 : i32
    %12 = vector.broadcast %c16_i32 : i32 to vector<2x1024xi32>
    %13 = arith.shrui %11, %12 : vector<2x1024xi32>
    %14 = arith.xori %11, %13 : vector<2x1024xi32>
    %c569420461_i32 = arith.constant 569420461 : i32
    %15 = vector.broadcast %c569420461_i32 : i32 to vector<2x1024xi32>
    %16 = arith.muli %14, %15 : vector<2x1024xi32>
    %c15_i32 = arith.constant 15 : i32
    %17 = vector.broadcast %c15_i32 : i32 to vector<2x1024xi32>
    %18 = arith.shrui %16, %17 : vector<2x1024xi32>
    %19 = arith.xori %16, %18 : vector<2x1024xi32>
    %c1935289751_i32 = arith.constant 1935289751 : i32
    %20 = vector.broadcast %c1935289751_i32 : i32 to vector<2x1024xi32>
    %21 = arith.muli %19, %20 : vector<2x1024xi32>
    %c15_i32_0 = arith.constant 15 : i32
    %22 = vector.broadcast %c15_i32_0 : i32 to vector<2x1024xi32>
    %23 = arith.shrui %21, %22 : vector<2x1024xi32>
    %24 = arith.xori %21, %23 : vector<2x1024xi32>
    %c9_i32 = arith.constant 9 : i32
    %25 = vector.broadcast %c9_i32 : i32 to vector<2x1024xi32>
    %26 = arith.shrui %24, %25 : vector<2x1024xi32>
    %c4194304_i32 = arith.constant 4194304 : i32
    %27 = vector.broadcast %c4194304_i32 : i32 to vector<2x1024xi32>
    %28 = arith.cmpi ult, %26, %27 : vector<2x1024xi32>
    %cst = arith.constant 2.000000e+00 : f32
    %cst_1 = arith.constant 0.000000e+00 : f32
    %29 = vector.broadcast %cst : f32 to vector<2x1024xf32>
    %30 = vector.broadcast %cst_1 : f32 to vector<2x1024xf32>
    %31 = arith.select %28, %29, %30 : vector<2x1024xi1>, vector<2x1024xf32>
    %c0_2 = arith.constant 0 : index
    %c0_3 = arith.constant 0 : index
    %32 = vector.load %arg4[%c0_2, %c0_3] : memref<2x1024xf32, #tpu.memory_space<vmem>>, vector<2x1024xf32>
    tpu.vector_store %arg4[%c0_2, %c0_3], %31 {strides = array<i32>} : memref<2x1024xf32, #tpu.memory_space<vmem>>, vector<2x1024xf32>,
    %c0_4 = arith.constant 0 : index
    %c0_5 = arith.constant 0 : index
    %33 = vector.load %arg2[%c0_4, %c0_5] : memref<2x1024xf32, #tpu.memory_space<vmem>>, vector<2x1024xf32>
    %34 = arith.mulf %33, %31 : vector<2x1024xf32>
    %c0_6 = arith.constant 0 : index
    %c0_7 = arith.constant 0 : index
    %35 = vector.load %arg3[%c0_6, %c0_7] : memref<2x1024xf32, #tpu.memory_space<vmem>>, vector<2x1024xf32>
    tpu.vector_store %arg3[%c0_6, %c0_7], %34 {strides = array<i32>} : memref<2x1024xf32, #tpu.memory_space<vmem>>, vector<2x1024xf32>,
    return
  }
  func.func @transform_0(%arg0: i32) -> i32 {
    %c0_i32 = arith.constant 0 : i32
    %c0_i32_0 = arith.constant 0 : i32
    return %c0_i32 : i32
  }
  func.func @transform_1(%arg0: i32) -> (i32, i32) {
    %c0_i32 = arith.constant 0 : i32
    %c0_i32_0 = arith.constant 0 : i32
    return %arg0, %c0_i32 : i32, i32
  }
  func.func @transform_2(%arg0: i32) -> (i32, i32) {
    %c0_i32 = arith.constant 0 : i32
    %c0_i32_0 = arith.constant 0 : i32
    return %arg0, %c0_i32 : i32, i32
  }
  func.func @transform_3(%arg0: i32) -> (i32, i32) {
    %c0_i32 = arith.constant 0 : i32
    %c0_i32_0 = arith.constant 0 : i32
    return %arg0, %c0_i32 : i32, i32
  }
}

</mosaic_0001>

<llo_original>
// kernel: tpu_custom_call.1
$region0: #{tpu_custom_call.1}
  #allocation0 [shape = 'u32[]', space=smem, size = 0x4, offset = 0x4, fixed_abs, tag = 'smem constant byte address 0x4 - core index']
  #allocation1 [shape = 'u32[72,128]{1,0:T(1,128)}', space=vmem, size = 0x9000, scoped, tag = 'internal scratch']
  #allocation2 [shape = 's32[1]{0:T(128)S(6)}', space=smem, size = 0x200, scoped, tag = 'scoped memory for tpu_custom_call.1']
  %s0 = inlined_call_operand.<no memory space> [shape: s32[1], index: 0, kind: input, shape index: {}]
  %s1 = inlined_call_operand.hbm [shape: f32[2,1024], index: 1, kind: input, shape index: {}]
  %s2 = inlined_call_operand.hbm [shape: f32[2,1024], index: 2, kind: output, shape index: {0}]
  %s3 = inlined_call_operand.hbm [shape: f32[2,1024], index: 3, kind: output, shape index: {1}]
  %4 = xla_tuple %s2, %s3
  %s5 = sld [smem:[#allocation0]]
  $region30: #{tpu_custom_call.1} parent=0
    _
  %s7 = ssub.s32 1, %s5
  %s8 = scalar_select 0, %s7, %s5
  %9 = sst [smem:[#allocation2]] %s0
  $region1: #{tpu_custom_call.1} parent=0
    #allocation3 [shape = 'u8[8192]{0}', space=vmem, size = 0x2000, scoped, tag = 'input window, operand 1, single buffered']
    #allocation4 [shape = 's32[1]{0}', space=sflag, size = 0x4, scoped, tag = 'scoped memory for tpu_custom_call.1']
    #allocation5 [shape = 's32[1]{0}', space=sflag, size = 0x4, scoped, tag = 'scoped memory for tpu_custom_call.1']
    #allocation6 [shape = 'u8[8192]{0}', space=vmem, size = 0x2000, scoped, tag = 'output window, operand 0, single buffered']
    #allocation7 [shape = 'u8[8192]{0}', space=vmem, size = 0x2000, scoped, tag = 'output window, operand 1, single buffered']
    #allocation8 [shape = 's32[1]{0}', space=sflag, size = 0x4, scoped, tag = 'scoped memory for tpu_custom_call.1']
    %10 = vsyncpa [#allocation4], 0
    %11 = vsyncpa [#allocation5], 0
    %12 = vsyncpa [#allocation8], 0
    // Predicated region
    $region2: #{tpu_custom_call.1} parent=1 // pred_check
      _
    $region3: #{tpu_custom_call.1} parent=1 // pred_check_branch
      %14 = sbr.rel (0) target = $region5
    $region4: #{tpu_custom_call.1} parent=1 // pred_region
      _
    $region5: #{tpu_custom_call.1} parent=1 // pred_fallthru
      _
    // Predicated region
    $region6: #{tpu_custom_call.1} parent=1 // pred_check
      _
    $region7: #{tpu_custom_call.1} parent=1 // pred_check_branch
      %16 = sbr.rel (0) target = $region9
    $region8: #{tpu_custom_call.1} parent=1 // pred_region
      %18 = vsyncadd [#allocation4], 0
      %s20 = sshll.u32 %s1, 4
      %s21 = int_to_ptr.hbm [resolvable:$true] %s20
      %s22 = sshll.u32 [#allocation3], 4
      %s23 = int_to_ptr.vmem [resolvable:$true] %s22
      %25 = dma.hbm_to_vmem [thread:$0]  %s21, 256, %s23, [#allocation4]
    $region9: #{tpu_custom_call.1} parent=1 // pred_fallthru
      _
    // Predicated region
    $region10: #{tpu_custom_call.1} parent=1 // pred_check
      _
    $region11: #{tpu_custom_call.1} parent=1 // pred_check_branch
      %27 = sbr.rel (0) target = $region13
    $region12: #{tpu_custom_call.1} parent=1 // pred_region
      %29 = dma.done [#allocation4], 256
    $region13: #{tpu_custom_call.1} parent=1 // pred_fallthru
      _
    %v30 = vlaneseq
    %v31 = vshrl.u32 %v30, 7
    %v32 = vlaneseq
    %v33 = vand.u32 %v32, 127
    %v34 = vadd.s32 %v33, 128
    %v35 = vadd.s32 %v33, 256
    %v36 = vadd.s32 %v33, 384
    %v37 = vadd.s32 %v33, 512
    %v38 = vadd.s32 %v33, 640
    %v39 = vadd.s32 %v33, 768
    %v40 = vadd.s32 %v33, 896
    %s41 = smul.u32 0, 2
    %v42 = vstv %s41
    %v43 = vadd.s32 %v42, %v31
    %v44 = vmul.u32 %v43, 1024
    %v45 = vadd.s32 %v44, %v33
    %v46 = vadd.s32 %v44, %v34
    %v47 = vadd.s32 %v44, %v35
    %v48 = vadd.s32 %v44, %v36
    %v49 = vadd.s32 %v44, %v37
    %v50 = vadd.s32 %v44, %v38
    %v51 = vadd.s32 %v44, %v39
    %v52 = vadd.s32 %v44, %v40
    %s53 = sld [smem:[#allocation2]]
    %s54 = smul.u32 %s53, 2654435769
    %v55 = vstv %s54
    %v56 = vadd.s32 %v45, %v55
    %v57 = vadd.s32 %v46, %v55
    %v58 = vadd.s32 %v47, %v55
    %v59 = vadd.s32 %v48, %v55
    %v60 = vadd.s32 %v49, %v55
    %v61 = vadd.s32 %v50, %v55
    %v62 = vadd.s32 %v51, %v55
    %v63 = vadd.s32 %v52, %v55
    %v64 = vshrl.u32 %v56, 16
    %v65 = vshrl.u32 %v57, 16
    %v66 = vshrl.u32 %v58, 16
    %v67 = vshrl.u32 %v59, 16
    %v68 = vshrl.u32 %v60, 16
    %v69 = vshrl.u32 %v61, 16
    %v70 = vshrl.u32 %v62, 16
    %v71 = vshrl.u32 %v63, 16
    %v72 = vxor.u32 %v56, %v64
    %v73 = vxor.u32 %v57, %v65
    %v74 = vxor.u32 %v58, %v66
    %v75 = vxor.u32 %v59, %v67
    %v76 = vxor.u32 %v60, %v68
    %v77 = vxor.u32 %v61, %v69
    %v78 = vxor.u32 %v62, %v70
    %v79 = vxor.u32 %v63, %v71
    %v80 = vmul.u32 %v72, 569420461
    %v81 = vmul.u32 %v73, 569420461
    %v82 = vmul.u32 %v74, 569420461
    %v83 = vmul.u32 %v75, 569420461
    %v84 = vmul.u32 %v76, 569420461
    %v85 = vmul.u32 %v77, 569420461
    %v86 = vmul.u32 %v78, 569420461
    %v87 = vmul.u32 %v79, 569420461
    %v88 = vshrl.u32 %v80, 15
    %v89 = vshrl.u32 %v81, 15
    %v90 = vshrl.u32 %v82, 15
    %v91 = vshrl.u32 %v83, 15
    %v92 = vshrl.u32 %v84, 15
    %v93 = vshrl.u32 %v85, 15
    %v94 = vshrl.u32 %v86, 15
    %v95 = vshrl.u32 %v87, 15
    %v96 = vxor.u32 %v80, %v88
    %v97 = vxor.u32 %v81, %v89
    %v98 = vxor.u32 %v82, %v90
    %v99 = vxor.u32 %v83, %v91
    %v100 = vxor.u32 %v84, %v92
    %v101 = vxor.u32 %v85, %v93
    %v102 = vxor.u32 %v86, %v94
    %v103 = vxor.u32 %v87, %v95
    %v104 = vmul.u32 %v96, 1935289751
    %v105 = vmul.u32 %v97, 1935289751
    %v106 = vmul.u32 %v98, 1935289751
    %v107 = vmul.u32 %v99, 1935289751
    %v108 = vmul.u32 %v100, 1935289751
    %v109 = vmul.u32 %v101, 1935289751
    %v110 = vmul.u32 %v102, 1935289751
    %v111 = vmul.u32 %v103, 1935289751
    %v112 = vshrl.u32 %v104, 15
    %v113 = vshrl.u32 %v105, 15
    %v114 = vshrl.u32 %v106, 15
    %v115 = vshrl.u32 %v107, 15
    %v116 = vshrl.u32 %v108, 15
    %v117 = vshrl.u32 %v109, 15
    %v118 = vshrl.u32 %v110, 15
    %v119 = vshrl.u32 %v111, 15
    %v120 = vxor.u32 %v104, %v112
    %v121 = vxor.u32 %v105, %v113
    %v122 = vxor.u32 %v106, %v114
    %v123 = vxor.u32 %v107, %v115
    %v124 = vxor.u32 %v108, %v116
    %v125 = vxor.u32 %v109, %v117
    %v126 = vxor.u32 %v110, %v118
    %v127 = vxor.u32 %v111, %v119
    %v128 = vshrl.u32 %v120, 9
    %v129 = vshrl.u32 %v121, 9
    %v130 = vshrl.u32 %v122, 9
    %v131 = vshrl.u32 %v123, 9
    %v132 = vshrl.u32 %v124, 9
    %v133 = vshrl.u32 %v125, 9
    %v134 = vshrl.u32 %v126, 9
    %v135 = vshrl.u32 %v127, 9
    %v136 = vadd.s32 %v128, 2147483648
    %vm138 = vcmp.lt.s32.totalorder %v136, 2151677952
    %v139 = vadd.s32 %v129, 2147483648
    %vm141 = vcmp.lt.s32.totalorder %v139, 2151677952
    %v142 = vadd.s32 %v130, 2147483648
    %vm144 = vcmp.lt.s32.totalorder %v142, 2151677952
    %v145 = vadd.s32 %v131, 2147483648
    %vm147 = vcmp.lt.s32.totalorder %v145, 2151677952
    %v148 = vadd.s32 %v132, 2147483648
    %vm150 = vcmp.lt.s32.totalorder %v148, 2151677952
    %v151 = vadd.s32 %v133, 2147483648
    %vm153 = vcmp.lt.s32.totalorder %v151, 2151677952
    %v154 = vadd.s32 %v134, 2147483648
    %vm156 = vcmp.lt.s32.totalorder %v154, 2151677952
    %v157 = vadd.s32 %v135, 2147483648
    %vm159 = vcmp.lt.s32.totalorder %v157, 2151677952
    %v160 = vsel %vm138, 2.0, 0.0
    %v161 = vsel %vm141, 2.0, 0.0
    %v162 = vsel %vm144, 2.0, 0.0
    %v163 = vsel %vm147, 2.0, 0.0
    %v164 = vsel %vm150, 2.0, 0.0
    %v165 = vsel %vm153, 2.0, 0.0
    %v166 = vsel %vm156, 2.0, 0.0
    %v167 = vsel %vm159, 2.0, 0.0
    %v176 = vrot.slane %v161, 6
    %v177 = vrot.slane %v162, 4
    %v178 = vrot.slane %v163, 2
    %v179 = vrot.slane %v165, 6
    %v180 = vrot.slane %v166, 4
    %v181 = vrot.slane %v167, 2
    %vm182 = vcmask 1041408
    %v183 = vsel %vm182, %v160, %v176
    %vm184 = vcmask 1045508
    %v185 = vsel %vm184, %v177, %v178
    %vm186 = vcmask 1043456
    %v187 = vsel %vm186, %v183, %v185
    %v188 = vsel %vm182, %v164, %v179
    %v189 = vsel %vm184, %v180, %v181
    %v190 = vsel %vm186, %v188, %v189
    %193 = vst [vmem:[#allocation7] sm:$0xff] %v187
    %194 = vst [vmem:[#allocation7 + $0x8] sm:$0xff] %v190
    %v195 = vld [vmem:[#allocation3] sm:$0xff]
    %v196 = vld [vmem:[#allocation3 + $0x8] sm:$0xff]
    %v197 = vmul.f32 %v195, %v187
    %v198 = vmul.f32 %v196, %v190
    %199 = vst [vmem:[#allocation6] sm:$0xff] %v197
    %200 = vst [vmem:[#allocation6 + $0x8] sm:$0xff] %v198
    // Predicated region
    $region14: #{tpu_custom_call.1} parent=1 // pred_check
      _
    $region15: #{tpu_custom_call.1} parent=1 // pred_check_branch
      %202 = sbr.rel (0) target = $region17
    $region16: #{tpu_custom_call.1} parent=1 // pred_region
      %204 = vsyncadd [#allocation5], 0
      %s206 = sshll.u32 [#allocation6], 4
      %s207 = int_to_ptr.vmem [resolvable:$true] %s206
      %s208 = sshll.u32 %s2, 4
      %s209 = int_to_ptr.hbm [resolvable:$true] %s208
      %211 = dma.vmem_to_hbm [thread:$0]  %s207, 256, %s209, [#allocation5]
    $region17: #{tpu_custom_call.1} parent=1 // pred_fallthru
      _
    // Predicated region
    $region18: #{tpu_custom_call.1} parent=1 // pred_check
      _
    $region19: #{tpu_custom_call.1} parent=1 // pred_check_branch
      %213 = sbr.rel (0) target = $region21
    $region20: #{tpu_custom_call.1} parent=1 // pred_region
      %215 = vsyncadd [#allocation8], 0
      %s217 = sshll.u32 [#allocation7], 4
      %s218 = int_to_ptr.vmem [resolvable:$true] %s217
      %s219 = sshll.u32 %s3, 4
      %s220 = int_to_ptr.hbm [resolvable:$true] %s219
      %222 = dma.vmem_to_hbm [thread:$0]  %s218, 256, %s220, [#allocation8]
    $region21: #{tpu_custom_call.1} parent=1 // pred_fallthru
      _
    // Predicated region
    $region22: #{tpu_custom_call.1} parent=1 // pred_check
      _
    $region23: #{tpu_custom_call.1} parent=1 // pred_check_branch
      %224 = sbr.rel (0) target = $region25
    $region24: #{tpu_custom_call.1} parent=1 // pred_region
      %226 = dma.done [#allocation5], 256
    $region25: #{tpu_custom_call.1} parent=1 // pred_fallthru
      _
    // Predicated region
    $region26: #{tpu_custom_call.1} parent=1 // pred_check
      _
    $region27: #{tpu_custom_call.1} parent=1 // pred_check_branch
      %228 = sbr.rel (0) target = $region29
    $region28: #{tpu_custom_call.1} parent=1 // pred_region
      %230 = dma.done [#allocation8], 256
    $region29: #{tpu_custom_call.1} parent=1 // pred_fallthru
      _
    %231 = vsyncpa [#allocation4], 1
    %232 = vsyncpa [#allocation5], 1
    %233 = vsyncpa [#allocation8], 1

</llo_original>
